<compile_context>
chip_gen: v5e
topology: v5e:2x2
jax: 0.10.0
libtpu: 0.0.40
codegen_flags: <defaults>
</compile_context>

<pallas_src>
import jax
import jax.numpy as jnp
from jax import lax
from jax.experimental import pallas as pl
from jax.experimental.pallas import tpu as pltpu


def _cdiv(a, b):
    return (a + b - 1) // b


def _round_up(x, m):
    return ((x + m - 1) // m) * m


# --------------------------------------------------------------------------
# Kernel 1: per-edge attention weights  edge_w^T  [E_pad, Fo_pad] (bf16)
# --------------------------------------------------------------------------
def _edge_w_kernel(alpha: float, f_out: int):
    def kernel(a_ref, eh_ref, w_ref):
        # eh_ref: [te, Dh_pad] bf16 ; a_ref: [Dh_pad, Fo_pad] bf16
        # edge_m^T, with the fused a_2 row living in column `f_out`.
        edge_m = jnp.dot(eh_ref[...], a_ref[...],
                         preferred_element_type=jnp.float32)     # [te, Fo_pad]

        z = edge_m[:, f_out:f_out + 1]                            # [te, 1]
        lrelu = jnp.where(z > 0, z, alpha * z)
        # Matches the reference exp(-leakyrelu(.)) (no max-subtraction, same
        # overflow behaviour as the PyTorch layer).
        edge_e = jnp.exp(-lrelu)                                  # [te, 1]

        # TODO(synk): nn.Dropout on edge_e is identity here (inference mode).

        # columns [0, f_out) = edge_e * edge_m ; column f_out = edge_e ;
        # padded columns stay zero (edge_m is zero there).
        col_ids = lax.broadcasted_iota(jnp.int32, edge_m.shape, 1)
        edge_w = jnp.where(col_ids == f_out, edge_e, edge_e * edge_m)
        w_ref[...] = edge_w.astype(w_ref.dtype)

    return kernel


# --------------------------------------------------------------------------
# Kernel 2: segment-sum scatter + normalize + ELU
# --------------------------------------------------------------------------
def _scatter_kernel(f_out: int, concat: bool, tile_n: int, tile_e: int):
    def kernel(src_ref, w_ref, out_ref, acc_ref):
        n_idx = pl.program_id(0)
        e_idx = pl.program_id(1)

        @pl.when(e_idx == 0)
        def _():
            acc_ref[...] = jnp.zeros_like(acc_ref)

        # One-hot scatter built in-kernel from src indices (padded edges have
        # src = -1 and never match a row id).
        row_ids = n_idx * tile_n + lax.broadcasted_iota(
            jnp.int32, (tile_n, tile_e), 0)                       # [tN, tE]
        one_hot = (row_ids == src_ref[...]).astype(jnp.bfloat16)  # [tN, tE]

        # Fused scatter matmul: numerator columns + e_rowsum column together.
        acc_ref[...] += jnp.dot(one_hot, w_ref[...],
                                preferred_element_type=jnp.float32)

        @pl.when(e_idx == pl.num_programs(1) - 1)
        def _():
            acc = acc_ref[...]
            rowsum = acc[:, f_out:f_out + 1]                      # [tN, 1]
            rowsum = jnp.where(rowsum == 0.0, 1e-12, rowsum)      # as reference
            h = acc / rowsum
            if concat:
                # ELU
                h = jnp.where(h > 0, h, jnp.exp(jnp.minimum(h, 0.0)) - 1.0)
            out_ref[...] = h.astype(out_ref.dtype)

    return kernel


# --------------------------------------------------------------------------
# Wrapper reproducing SpGraphAttentionLayer.forward (inference)
# --------------------------------------------------------------------------
def sp_graph_attention_forward(inp, edge, edge_embed, edge_list_nhop,
                               edge_embed_nhop, a, a_2, alpha=0.2, concat=True,
                               tile_e=1024, tile_n=256):
    N, in_features = inp.shape
    out_features = a.shape[0]
    nrela_dim = edge_embed.shape[1]
    d_h = 2 * in_features + nrela_dim

    # --- glue: concat edges / relation embeddings, gather node features ---
    edge_all = jnp.concatenate([edge, edge_list_nhop], axis=1)           # [2, E]
    embed_all = jnp.concatenate([edge_embed, edge_embed_nhop], axis=0)   # [E, R]
    E = edge_all.shape[1]

    src = edge_all[0].astype(jnp.int32)   # [E]
    dst = edge_all[1].astype(jnp.int32)   # [E]

    # edge_h^T : [E, Dh]  (edges along sublanes -> no transpose needed later)
    edge_h_t = jnp.concatenate(
        [inp[src, :], inp[dst, :], embed_all], axis=1).astype(jnp.float32)

    # --- adaptive, overshoot-free padding / tiling ---
    fo_pad = _round_up(out_features + 1, 128)     # +1 fused a_2 / rowsum column
    dh_pad = _round_up(d_h, 128)

    e128 = _round_up(E, 128)
    e_blocks = _cdiv(e128, tile_e)
    te = _round_up(_cdiv(e128, e_blocks), 128)
    e_pad = e_blocks * te

    n128 = _round_up(N, 128)
    n_blocks = _cdiv(n128, tile_n)
    tn = _round_up(_cdiv(n128, n_blocks), 128)
    n_pad = n_blocks * tn

    # --- build padded operands directly in bf16 (no full-size f32 copies) ---
    a32 = a.astype(jnp.float32)
    a2_row = a_2.astype(jnp.float32) @ a32                        # [1, Dh]
    a_aug_t = jnp.concatenate([a32, a2_row], axis=0).T            # [Dh, F_out+1]
    a_aug_t = jnp.pad(a_aug_t.astype(jnp.bfloat16),
                      ((0, dh_pad - d_h), (0, fo_pad - (out_features + 1))))

    edge_h_p = jnp.pad(edge_h_t.astype(jnp.bfloat16),
                       ((0, e_pad - E), (0, dh_pad - d_h)))       # [E_pad, Dh_pad]

    # int32 src indices, padded edges get -1 so they scatter nowhere.
    src_p = jnp.full((1, e_pad), -1, dtype=jnp.int32).at[0, :E].set(src)

    # ---------------- Kernel 1: edge_w^T [E_pad, Fo_pad] bf16 ----------------
    cost1 = pl.CostEstimate(
        flops=2 * e_pad * dh_pad * fo_pad,
        transcendentals=e_pad,
        bytes_accessed=(e_pad * dh_pad * 2 + dh_pad * fo_pad * 2
                        + e_pad * fo_pad * 2),
    )
    edge_w = pl.pallas_call(
        _edge_w_kernel(float(alpha), out_features),
        out_shape=jax.ShapeDtypeStruct((e_pad, fo_pad), jnp.bfloat16),
        grid_spec=pltpu.PrefetchScalarGridSpec(
            num_scalar_prefetch=0,
            grid=(e_blocks,),
            in_specs=[
                pl.BlockSpec((dh_pad, fo_pad), lambda e: (0, 0)),   # a_aug^T
                pl.BlockSpec((te, dh_pad), lambda e: (e, 0)),       # edge_h^T
            ],
            out_specs=pl.BlockSpec((te, fo_pad), lambda e: (e, 0)),
        ),
        compiler_params=pltpu.CompilerParams(
            dimension_semantics=("parallel",)),
        cost_estimate=cost1,
    )(a_aug_t, edge_h_p)

    # ---------------- Kernel 2: scatter + normalize + ELU --------------------
    cost2 = pl.CostEstimate(
        flops=2 * n_pad * e_pad * fo_pad,
        transcendentals=n_pad * fo_pad,
        bytes_accessed=(n_blocks * (e_pad * fo_pad * 2 + e_pad * 4)
                        + n_pad * fo_pad * 4),
    )
    out = pl.pallas_call(
        _scatter_kernel(out_features, bool(concat), tn, te),
        out_shape=jax.ShapeDtypeStruct((n_pad, fo_pad), jnp.float32),
        grid_spec=pltpu.PrefetchScalarGridSpec(
            num_scalar_prefetch=0,
            grid=(n_blocks, e_blocks),
            in_specs=[
                pl.BlockSpec((1, te), lambda n, e: (0, e)),         # src ids
                pl.BlockSpec((te, fo_pad), lambda n, e: (e, 0)),    # edge_w^T
            ],
            out_specs=pl.BlockSpec((tn, fo_pad), lambda n, e: (n, 0)),
            scratch_shapes=[pltpu.VMEM((tn, fo_pad), jnp.float32)],
        ),
        compiler_params=pltpu.CompilerParams(
            dimension_semantics=("parallel", "arbitrary")),
        cost_estimate=cost2,
    )(src_p, edge_w)

    # Strip padding (incl. the fused rowsum column).
    return out[:N, :out_features]


def xavier_normal(key, shape, gain=1.414):
    fan_out, fan_in = shape
    std = gain * (2.0 / (fan_in + fan_out)) ** 0.5
    return std * jax.random.normal(key, shape, dtype=jnp.float32)


if __name__ == "__main__":
    # Small, deterministic example consistent with the module's forward.
    num_nodes = 16
    in_features = 8
    out_features = 8
    nrela_dim = 4
    E1 = 24          # direct edges
    E2 = 8           # n-hop edges
    alpha = 0.2

    key = jax.random.PRNGKey(0)
    k1, k2, k3, k4, k5, k6, k7 = jax.random.split(key, 7)

    # Parameters (deterministic xavier-normal init, as in __init__).
    a = xavier_normal(k1, (out_features, 2 * in_features + nrela_dim))
    a_2 = xavier_normal(k2, (1, out_features))

    # Inputs.
    x = jax.random.normal(k3, (num_nodes, in_features), dtype=jnp.float32)
    edge = jax.random.randint(k4, (2, E1), 0, num_nodes, dtype=jnp.int32)
    edge_embed = jax.random.normal(k5, (E1, nrela_dim), dtype=jnp.float32)
    edge_list_nhop = jax.random.randint(k6, (2, E2), 0, num_nodes, dtype=jnp.int32)
    edge_embed_nhop = jax.random.normal(k7, (E2, nrela_dim), dtype=jnp.float32)

    out = sp_graph_attention_forward(
        x, edge, edge_embed, edge_list_nhop, edge_embed_nhop,
        a, a_2, alpha=alpha, concat=True)
    out = jax.block_until_ready(out)

    assert out.shape == (num_nodes, out_features)
    assert not bool(jnp.any(jnp.isnan(out)))
    print("KERNEL_OK")
</pallas_src>

<mosaic_0001>
module attributes {stable_mosaic.version = 11 : i64} {
  func.func @kernel(%arg0: i32, %arg1: memref<128x128xbf16, #tpu.memory_space<vmem>>, %arg2: memref<128x128xbf16, #tpu.memory_space<vmem>>, %arg3: memref<128x128xbf16, #tpu.memory_space<vmem>>) attributes {dimension_semantics = [#tpu.dimension_semantics<parallel>], iteration_bounds = array<i64: 1>, scalar_prefetch = 0 : i64, scratch_operands = 0 : i64, tpu.core_type = #tpu.core_type<tc>, window_params = [{pipeline_mode = #tpu.pipeline_mode<synchronous>, transform_indices = @transform_0, window_bounds = array<i64: 128, 128>}, {transform_indices = @transform_1, window_bounds = array<i64: 128, 128>}, {transform_indices = @transform_2, window_bounds = array<i64: 128, 128>}]} {
    %c0 = arith.constant 0 : index
    %c0_0 = arith.constant 0 : index
    %0 = vector.load %arg2[%c0, %c0_0] : memref<128x128xbf16, #tpu.memory_space<vmem>>, vector<128x128xbf16>
    %c0_1 = arith.constant 0 : index
    %c0_2 = arith.constant 0 : index
    %1 = vector.load %arg1[%c0_1, %c0_2] : memref<128x128xbf16, #tpu.memory_space<vmem>>, vector<128x128xbf16>
    %cst = arith.constant dense<0.000000e+00> : vector<128x128xf32>
    %2 = tpu.matmul %0, %1, %cst {dimension_numbers = #tpu.dot_dimension_numbers<[1], [0], [0], [1], [0, 0, 1, 1], [], []>} : vector<128x128xbf16>, vector<128x128xbf16>, vector<128x128xf32> -> vector<128x128xf32>
    %3 = vector.extract_strided_slice %2 {offsets = [0, 8], sizes = [128, 1], strides = [1, 1]} : vector<128x128xf32> to vector<128x1xf32>
    %cst_3 = arith.constant 0.000000e+00 : f32
    %4 = vector.broadcast %cst_3 : f32 to vector<128x1xf32>
    %5 = arith.cmpf ogt, %3, %4 : vector<128x1xf32>
    %cst_4 = arith.constant 2.000000e-01 : f32
    %6 = vector.broadcast %cst_4 : f32 to vector<128x1xf32>
    %7 = arith.mulf %6, %3 : vector<128x1xf32>
    %8 = arith.select %5, %3, %7 : vector<128x1xi1>, vector<128x1xf32>
    %cst_5 = arith.constant 0.000000e+00 : f32
    %9 = vector.broadcast %cst_5 : f32 to vector<128x1xf32>
    %10 = arith.subf %9, %8 : vector<128x1xf32>
    %11 = math.exp %10 : vector<128x1xf32>
    %12 = tpu.iota {dimensions = array<i32: 1>} : vector<128x128xi32>
    %c8_i32 = arith.constant 8 : i32
    %13 = vector.broadcast %c8_i32 : i32 to vector<128x128xi32>
    %14 = arith.cmpi eq, %12, %13 : vector<128x128xi32>
    %15 = vector.broadcast %11 : vector<128x1xf32> to vector<128x128xf32>
    %16 = arith.mulf %15, %2 : vector<128x128xf32>
    %17 = vector.shape_cast %11 : vector<128x1xf32> to vector<128x1xf32>
    %18 = vector.broadcast %17 : vector<128x1xf32> to vector<128x128xf32>
    %19 = arith.select %14, %18, %16 : vector<128x128xi1>, vector<128x128xf32>
    %20 = arith.truncf %19 : vector<128x128xf32> to vector<128x128xbf16>
    %c0_6 = arith.constant 0 : index
    %c0_7 = arith.constant 0 : index
    %21 = vector.load %arg3[%c0_6, %c0_7] : memref<128x128xbf16, #tpu.memory_space<vmem>>, vector<128x128xbf16>
    tpu.vector_store %arg3[%c0_6, %c0_7], %20 {strides = array<i32>} : memref<128x128xbf16, #tpu.memory_space<vmem>>, vector<128x128xbf16>,
    return
  }
  func.func @transform_0(%arg0: i32) -> (i32, i32) {
    %c0_i32 = arith.constant 0 : i32
    %c0_i32_0 = arith.constant 0 : i32
    %c0_i32_1 = arith.constant 0 : i32
    return %c0_i32, %c0_i32_0 : i32, i32
  }
  func.func @transform_1(%arg0: i32) -> (i32, i32) {
    %c0_i32 = arith.constant 0 : i32
    %c0_i32_0 = arith.constant 0 : i32
    return %arg0, %c0_i32 : i32, i32
  }
  func.func @transform_2(%arg0: i32) -> (i32, i32) {
    %c0_i32 = arith.constant 0 : i32
    %c0_i32_0 = arith.constant 0 : i32
    return %arg0, %c0_i32 : i32, i32
  }
}

</mosaic_0001>

<llo_original>
// kernel: tpu_custom_call.1
$region0: #{tpu_custom_call.1}
  #allocation0 [shape = 'u32[]', space=smem, size = 0x4, offset = 0x4, fixed_abs, tag = 'smem constant byte address 0x4 - core index']
  #allocation1 [shape = 'u32[72,128]{1,0:T(1,128)}', space=vmem, size = 0x9000, scoped, tag = 'internal scratch']
  %s0 = inlined_call_operand.hbm [shape: bf16[128,128], index: 0, kind: input, shape index: {}]
  %s1 = inlined_call_operand.hbm [shape: bf16[128,128], index: 1, kind: input, shape index: {}]
  %s2 = inlined_call_operand.hbm [shape: bf16[128,128], index: 2, kind: output, shape index: {}]
  %s3 = sld [smem:[#allocation0]]
  $region26: #{tpu_custom_call.1} parent=0
    _
  %s5 = ssub.s32 1, %s3
  %s6 = scalar_select 0, %s5, %s3
  $region1: #{tpu_custom_call.1} parent=0
    #allocation2 [shape = 'u8[32768]{0}', space=vmem, size = 0x8000, scoped, tag = 'input window, operand 0, single buffered']
    #allocation3 [shape = 's32[1]{0}', space=sflag, size = 0x4, scoped, tag = 'scoped memory for tpu_custom_call.1']
    #allocation4 [shape = 's32[1]{0}', space=sflag, size = 0x4, scoped, tag = 'scoped memory for tpu_custom_call.1']
    #allocation5 [shape = 'u8[32768]{0}', space=vmem, size = 0x8000, scoped, tag = 'input window, operand 1, single buffered']
    #allocation6 [shape = 's32[1]{0}', space=sflag, size = 0x4, scoped, tag = 'scoped memory for tpu_custom_call.1']
    #allocation7 [shape = 'u8[32768]{0}', space=vmem, size = 0x8000, scoped, tag = 'output window, operand 0, single buffered']
    %7 = vsyncpa [#allocation3], 0
    %8 = vsyncpa [#allocation6], 0
    %9 = vsyncpa [#allocation4], 0
    // Predicated region
    $region2: #{tpu_custom_call.1} parent=1 // pred_check
      _
    $region3: #{tpu_custom_call.1} parent=1 // pred_check_branch
      %11 = sbr.rel (0) target = $region5
    $region4: #{tpu_custom_call.1} parent=1 // pred_region
      %13 = vsyncadd [#allocation3], 0
      %s14 = sshll.u32 %s0, 4
      %s15 = int_to_ptr.hbm [resolvable:$true] %s14
      %s16 = sshll.u32 [#allocation2], 4
      %s17 = int_to_ptr.vmem [resolvable:$true] %s16
      %22 = dma.hbm_to_vmem [thread:$0]  %s15, 1024, %s17, [#allocation3], 64, 64, 4
    $region5: #{tpu_custom_call.1} parent=1 // pred_fallthru
      _
    // Predicated region
    $region6: #{tpu_custom_call.1} parent=1 // pred_check
      _
    $region7: #{tpu_custom_call.1} parent=1 // pred_check_branch
      %24 = sbr.rel (0) target = $region9
    $region8: #{tpu_custom_call.1} parent=1 // pred_region
      %26 = vsyncadd [#allocation6], 0
      %s27 = sshll.u32 %s1, 4
      %s28 = int_to_ptr.hbm [resolvable:$true] %s27
      %s29 = sshll.u32 [#allocation5], 4
      %s30 = int_to_ptr.vmem [resolvable:$true] %s29
      %35 = dma.hbm_to_vmem [thread:$0]  %s28, 1024, %s30, [#allocation6], 64, 64, 4
    $region9: #{tpu_custom_call.1} parent=1 // pred_fallthru
      _
    // Predicated region
    $region10: #{tpu_custom_call.1} parent=1 // pred_check
      _
    $region11: #{tpu_custom_call.1} parent=1 // pred_check_branch
      %37 = sbr.rel (0) target = $region13
    $region12: #{tpu_custom_call.1} parent=1 // pred_region
      %39 = dma.done [#allocation3], 1024
    $region13: #{tpu_custom_call.1} parent=1 // pred_fallthru
      _
    // Predicated region
    $region14: #{tpu_custom_call.1} parent=1 // pred_check
      _
    $region15: #{tpu_custom_call.1} parent=1 // pred_check_branch
      %41 = sbr.rel (0) target = $region17
    $region16: #{tpu_custom_call.1} parent=1 // pred_region
      %43 = dma.done [#allocation6], 1024
    $region17: #{tpu_custom_call.1} parent=1 // pred_fallthru
      _
    %v44 = vld [vmem:[#allocation5] sm:$0xf]
    %v45 = vld [vmem:[#allocation5 + $0x4] sm:$0xf]
    %v46 = vld [vmem:[#allocation5 + $0x8] sm:$0xf]
    %v47 = vld [vmem:[#allocation5 + $0xc] sm:$0xf]
    %v48 = vld [vmem:[#allocation5 + $0x10] sm:$0xf]
    %v49 = vld [vmem:[#allocation5 + $0x14] sm:$0xf]
    %v50 = vld [vmem:[#allocation5 + $0x18] sm:$0xf]
    %v51 = vld [vmem:[#allocation5 + $0x1c] sm:$0xf]
    %v52 = vld [vmem:[#allocation5 + $0x20] sm:$0xf]
    %v53 = vld [vmem:[#allocation5 + $0x24] sm:$0xf]
    %v54 = vld [vmem:[#allocation5 + $0x28] sm:$0xf]
    %v55 = vld [vmem:[#allocation5 + $0x2c] sm:$0xf]
    %v56 = vld [vmem:[#allocation5 + $0x30] sm:$0xf]
    %v57 = vld [vmem:[#allocation5 + $0x34] sm:$0xf]
    %v58 = vld [vmem:[#allocation5 + $0x38] sm:$0xf]
    %v59 = vld [vmem:[#allocation5 + $0x3c] sm:$0xf]
    %v60 = vld [vmem:[#allocation2] sm:$0xf]
    %v61 = vld [vmem:[#allocation2 + $0x4] sm:$0xf]
    %v62 = vld [vmem:[#allocation2 + $0x8] sm:$0xf]
    %v63 = vld [vmem:[#allocation2 + $0xc] sm:$0xf]
    %v64 = vld [vmem:[#allocation2 + $0x10] sm:$0xf]
    %v65 = vld [vmem:[#allocation2 + $0x14] sm:$0xf]
    %v66 = vld [vmem:[#allocation2 + $0x18] sm:$0xf]
    %v67 = vld [vmem:[#allocation2 + $0x1c] sm:$0xf]
    %v68 = vld [vmem:[#allocation2 + $0x20] sm:$0xf]
    %v69 = vld [vmem:[#allocation2 + $0x24] sm:$0xf]
    %v70 = vld [vmem:[#allocation2 + $0x28] sm:$0xf]
    %v71 = vld [vmem:[#allocation2 + $0x2c] sm:$0xf]
    %v72 = vld [vmem:[#allocation2 + $0x30] sm:$0xf]
    %v73 = vld [vmem:[#allocation2 + $0x34] sm:$0xf]
    %v74 = vld [vmem:[#allocation2 + $0x38] sm:$0xf]
    %v75 = vld [vmem:[#allocation2 + $0x3c] sm:$0xf]
    %v92 = vunpack.c.l.b16 %v44
    %v93 = vunpack.c.l.b16 %v45
    %v94 = vunpack.c.l.b16 %v46
    %v95 = vunpack.c.l.b16 %v47
    %v96 = vunpack.c.l.b16 %v48
    %v97 = vunpack.c.l.b16 %v49
    %v98 = vunpack.c.l.b16 %v50
    %v99 = vunpack.c.l.b16 %v51
    %v100 = vunpack.c.l.b16 %v52
    %v101 = vunpack.c.l.b16 %v53
    %v102 = vunpack.c.l.b16 %v54
    %v103 = vunpack.c.l.b16 %v55
    %v104 = vunpack.c.l.b16 %v56
    %v105 = vunpack.c.l.b16 %v57
    %v106 = vunpack.c.l.b16 %v58
    %v107 = vunpack.c.l.b16 %v59
    %v108 = vpack.c.b16 %v93, %v92
    %v109 = vpack.c.b16 %v95, %v94
    %v110 = vpack.c.b16 %v97, %v96
    %v111 = vpack.c.b16 %v99, %v98
    %v112 = vpack.c.b16 %v101, %v100
    %v113 = vpack.c.b16 %v103, %v102
    %v114 = vpack.c.b16 %v105, %v104
    %v115 = vpack.c.b16 %v107, %v106
    %v140 = vunpack.c.l.b16 %v60
    %v141 = vunpack.c.l.b16 %v61
    %v142 = vunpack.c.l.b16 %v62
    %v143 = vunpack.c.l.b16 %v63
    %v144 = vunpack.c.l.b16 %v64
    %v145 = vunpack.c.l.b16 %v65
    %v146 = vunpack.c.l.b16 %v66
    %v147 = vunpack.c.l.b16 %v67
    %v148 = vunpack.c.l.b16 %v68
    %v149 = vunpack.c.l.b16 %v69
    %v150 = vunpack.c.l.b16 %v70
    %v151 = vunpack.c.l.b16 %v71
    %v152 = vunpack.c.l.b16 %v72
    %v153 = vunpack.c.l.b16 %v73
    %v154 = vunpack.c.l.b16 %v74
    %v155 = vunpack.c.l.b16 %v75
    %v156 = vpack.c.b16 %v141, %v140
    %v157 = vpack.c.b16 %v143, %v142
    %v158 = vpack.c.b16 %v145, %v144
    %v159 = vpack.c.b16 %v147, %v146
    %v160 = vpack.c.b16 %v149, %v148
    %v161 = vpack.c.b16 %v151, %v150
    %v162 = vpack.c.b16 %v153, %v152
    %v163 = vpack.c.b16 %v155, %v154
    %172 = vmatpush.bf16.msra.mxu0 %v163
    %173 = vmatpush.bf16.msra.mxu0 %v162
    %174 = vmatpush.bf16.msra.mxu0 %v161
    %175 = vmatpush.bf16.msra.mxu0 %v160
    %176 = vmatpush.bf16.msra.mxu0 %v159
    %177 = vmatpush.bf16.msra.mxu0 %v158
    %178 = vmatpush.bf16.msra.mxu0 %v157
    %179 = vmatpush.bf16.msra.mxu0 %v156
    %180 = vmatmul.bf16.gmra.mxu0 %v108
    %v181 = vpop.f32.mrf.mxu0
    %v182 = vadd.f32 0.0, %v181
    %v183 = vpop.f32.mrf.mxu0
    %v184 = vadd.f32 0.0, %v183
    %185 = vmatmul.bf16.gmra.mxu0 %v109
    %v186 = vpop.f32.mrf.mxu0
    %v187 = vadd.f32 0.0, %v186
    %v188 = vpop.f32.mrf.mxu0
    %v189 = vadd.f32 0.0, %v188
    %190 = vmatmul.bf16.gmra.mxu0 %v110
    %v191 = vpop.f32.mrf.mxu0
    %v192 = vadd.f32 0.0, %v191
    %v193 = vpop.f32.mrf.mxu0
    %v194 = vadd.f32 0.0, %v193
    %195 = vmatmul.bf16.gmra.mxu0 %v111
    %v196 = vpop.f32.mrf.mxu0
    %v197 = vadd.f32 0.0, %v196
    %v198 = vpop.f32.mrf.mxu0
    %v199 = vadd.f32 0.0, %v198
    %200 = vmatmul.bf16.gmra.mxu0 %v112
    %v201 = vpop.f32.mrf.mxu0
    %v202 = vadd.f32 0.0, %v201
    %v203 = vpop.f32.mrf.mxu0
    %v204 = vadd.f32 0.0, %v203
    %205 = vmatmul.bf16.gmra.mxu0 %v113
    %v206 = vpop.f32.mrf.mxu0
    %v207 = vadd.f32 0.0, %v206
    %v208 = vpop.f32.mrf.mxu0
    %v209 = vadd.f32 0.0, %v208
    %210 = vmatmul.bf16.gmra.mxu0 %v114
    %v211 = vpop.f32.mrf.mxu0
    %v212 = vadd.f32 0.0, %v211
    %v213 = vpop.f32.mrf.mxu0
    %v214 = vadd.f32 0.0, %v213
    %215 = vmatmul.bf16.gmra.mxu0 %v115
    %v216 = vpop.f32.mrf.mxu0
    %v217 = vadd.f32 0.0, %v216
    %v218 = vpop.f32.mrf.mxu0
    %v219 = vadd.f32 0.0, %v218
    %220 = vdwg.mxu0
    %vm221 = vcmp.gt.f32.partialorder %v182, 0.0
    %vm222 = vcmp.gt.f32.partialorder %v184, 0.0
    %vm223 = vcmp.gt.f32.partialorder %v187, 0.0
    %vm224 = vcmp.gt.f32.partialorder %v189, 0.0
    %vm225 = vcmp.gt.f32.partialorder %v192, 0.0
    %vm226 = vcmp.gt.f32.partialorder %v194, 0.0
    %vm227 = vcmp.gt.f32.partialorder %v197, 0.0
    %vm228 = vcmp.gt.f32.partialorder %v199, 0.0
    %vm229 = vcmp.gt.f32.partialorder %v202, 0.0
    %vm230 = vcmp.gt.f32.partialorder %v204, 0.0
    %vm231 = vcmp.gt.f32.partialorder %v207, 0.0
    %vm232 = vcmp.gt.f32.partialorder %v209, 0.0
    %vm233 = vcmp.gt.f32.partialorder %v212, 0.0
    %vm234 = vcmp.gt.f32.partialorder %v214, 0.0
    %vm235 = vcmp.gt.f32.partialorder %v217, 0.0
    %vm236 = vcmp.gt.f32.partialorder %v219, 0.0
    %v237 = vmul.f32 %v182, 0.2
    %v238 = vmul.f32 %v184, 0.2
    %v239 = vmul.f32 %v187, 0.2
    %v240 = vmul.f32 %v189, 0.2
    %v241 = vmul.f32 %v192, 0.2
    %v242 = vmul.f32 %v194, 0.2
    %v243 = vmul.f32 %v197, 0.2
    %v244 = vmul.f32 %v199, 0.2
    %v245 = vmul.f32 %v202, 0.2
    %v246 = vmul.f32 %v204, 0.2
    %v247 = vmul.f32 %v207, 0.2
    %v248 = vmul.f32 %v209, 0.2
    %v249 = vmul.f32 %v212, 0.2
    %v250 = vmul.f32 %v214, 0.2
    %v251 = vmul.f32 %v217, 0.2
    %v252 = vmul.f32 %v219, 0.2
    %v253 = vsel %vm221, %v182, %v237
    %v254 = vsel %vm222, %v184, %v238
    %v255 = vsel %vm223, %v187, %v239
    %v256 = vsel %vm224, %v189, %v240
    %v257 = vsel %vm225, %v192, %v241
    %v258 = vsel %vm226, %v194, %v242
    %v259 = vsel %vm227, %v197, %v243
    %v260 = vsel %vm228, %v199, %v244
    %v261 = vsel %vm229, %v202, %v245
    %v262 = vsel %vm230, %v204, %v246
    %v263 = vsel %vm231, %v207, %v247
    %v264 = vsel %vm232, %v209, %v248
    %v265 = vsel %vm233, %v212, %v249
    %v266 = vsel %vm234, %v214, %v250
    %v267 = vsel %vm235, %v217, %v251
    %v268 = vsel %vm236, %v219, %v252
    %v269 = vsub.f32 0.0, %v253
    %v270 = vsub.f32 0.0, %v254
    %v271 = vsub.f32 0.0, %v255
    %v272 = vsub.f32 0.0, %v256
    %v273 = vsub.f32 0.0, %v257
    %v274 = vsub.f32 0.0, %v258
    %v275 = vsub.f32 0.0, %v259
    %v276 = vsub.f32 0.0, %v260
    %v277 = vsub.f32 0.0, %v261
    %v278 = vsub.f32 0.0, %v262
    %v279 = vsub.f32 0.0, %v263
    %v280 = vsub.f32 0.0, %v264
    %v281 = vsub.f32 0.0, %v265
    %v282 = vsub.f32 0.0, %v266
    %v283 = vsub.f32 0.0, %v267
    %v284 = vsub.f32 0.0, %v268
    %v285 = vmul.f32 %v269, 1.442695
    %v286 = vpow.pop %v285
    %v287 = vmul.f32 %v270, 1.442695
    %v288 = vpow.pop %v287
    %v289 = vmul.f32 %v271, 1.442695
    %v290 = vpow.pop %v289
    %v291 = vmul.f32 %v272, 1.442695
    %v292 = vpow.pop %v291
    %v293 = vmul.f32 %v273, 1.442695
    %v294 = vpow.pop %v293
    %v295 = vmul.f32 %v274, 1.442695
    %v296 = vpow.pop %v295
    %v297 = vmul.f32 %v275, 1.442695
    %v298 = vpow.pop %v297
    %v299 = vmul.f32 %v276, 1.442695
    %v300 = vpow.pop %v299
    %v301 = vmul.f32 %v277, 1.442695
    %v302 = vpow.pop %v301
    %v303 = vmul.f32 %v278, 1.442695
    %v304 = vpow.pop %v303
    %v305 = vmul.f32 %v279, 1.442695
    %v306 = vpow.pop %v305
    %v307 = vmul.f32 %v280, 1.442695
    %v308 = vpow.pop %v307
    %v309 = vmul.f32 %v281, 1.442695
    %v310 = vpow.pop %v309
    %v311 = vmul.f32 %v282, 1.442695
    %v312 = vpow.pop %v311
    %v313 = vmul.f32 %v283, 1.442695
    %v314 = vpow.pop %v313
    %v315 = vmul.f32 %v284, 1.442695
    %v316 = vpow.pop %v315
    %v317 = vlaneseq
    %v318 = vand.u32 %v317, 127
    %vm319 = vcmp.eq.s32.totalorder %v318, 8
    %321 = vset.pattern.permute.xlu0 8
    %322 = vperm.xlu0 %321, %v286
    %v323 = vpop.permute.xlu0 %322
    %326 = vset.pattern.permute.xlu0 8
    %327 = vperm.xlu0 %326, %v288
    %v328 = vpop.permute.xlu0 %327
    %331 = vset.pattern.permute.xlu0 8
    %332 = vperm.xlu0 %331, %v290
    %v333 = vpop.permute.xlu0 %332
    %336 = vset.pattern.permute.xlu0 8
    %337 = vperm.xlu0 %336, %v292
    %v338 = vpop.permute.xlu0 %337
    %341 = vset.pattern.permute.xlu0 8
    %342 = vperm.xlu0 %341, %v294
    %v343 = vpop.permute.xlu0 %342
    %346 = vset.pattern.permute.xlu0 8
    %347 = vperm.xlu0 %346, %v296
    %v348 = vpop.permute.xlu0 %347
    %351 = vset.pattern.permute.xlu0 8
    %352 = vperm.xlu0 %351, %v298
    %v353 = vpop.permute.xlu0 %352
    %356 = vset.pattern.permute.xlu0 8
    %357 = vperm.xlu0 %356, %v300
    %v358 = vpop.permute.xlu0 %357
    %361 = vset.pattern.permute.xlu0 8
    %362 = vperm.xlu0 %361, %v302
    %v363 = vpop.permute.xlu0 %362
    %366 = vset.pattern.permute.xlu0 8
    %367 = vperm.xlu0 %366, %v304
    %v368 = vpop.permute.xlu0 %367
    %371 = vset.pattern.permute.xlu0 8
    %372 = vperm.xlu0 %371, %v306
    %v373 = vpop.permute.xlu0 %372
    %376 = vset.pattern.permute.xlu0 8
    %377 = vperm.xlu0 %376, %v308
    %v378 = vpop.permute.xlu0 %377
    %381 = vset.pattern.permute.xlu0 8
    %382 = vperm.xlu0 %381, %v310
    %v383 = vpop.permute.xlu0 %382
    %386 = vset.pattern.permute.xlu0 8
    %387 = vperm.xlu0 %386, %v312
    %v388 = vpop.permute.xlu0 %387
    %391 = vset.pattern.permute.xlu0 8
    %392 = vperm.xlu0 %391, %v314
    %v393 = vpop.permute.xlu0 %392
    %396 = vset.pattern.permute.xlu0 8
    %397 = vperm.xlu0 %396, %v316
    %v398 = vpop.permute.xlu0 %397
    %v400 = vmul.f32 %v323, %v182
    %v401 = vmul.f32 %v328, %v184
    %v402 = vmul.f32 %v333, %v187
    %v403 = vmul.f32 %v338, %v189
    %v404 = vmul.f32 %v343, %v192
    %v405 = vmul.f32 %v348, %v194
    %v406 = vmul.f32 %v353, %v197
    %v407 = vmul.f32 %v358, %v199
    %v408 = vmul.f32 %v363, %v202
    %v409 = vmul.f32 %v368, %v204
    %v410 = vmul.f32 %v373, %v207
    %v411 = vmul.f32 %v378, %v209
    %v412 = vmul.f32 %v383, %v212
    %v413 = vmul.f32 %v388, %v214
    %v414 = vmul.f32 %v393, %v217
    %v415 = vmul.f32 %v398, %v219
    %v416 = vsel %vm319, %v323, %v400
    %v417 = vsel %vm319, %v328, %v401
    %v418 = vsel %vm319, %v333, %v402
    %v419 = vsel %vm319, %v338, %v403
    %v420 = vsel %vm319, %v343, %v404
    %v421 = vsel %vm319, %v348, %v405
    %v422 = vsel %vm319, %v353, %v406
    %v423 = vsel %vm319, %v358, %v407
    %v424 = vsel %vm319, %v363, %v408
    %v425 = vsel %vm319, %v368, %v409
    %v426 = vsel %vm319, %v373, %v410
    %v427 = vsel %vm319, %v378, %v411
    %v428 = vsel %vm319, %v383, %v412
    %v429 = vsel %vm319, %v388, %v413
    %v430 = vsel %vm319, %v393, %v414
    %v431 = vsel %vm319, %v398, %v415
    %v432 = vpack.c.bf16 %v416, %v416
    %v433 = vpack.c.bf16 %v417, %v417
    %v434 = vpack.c.bf16 %v418, %v418
    %v435 = vpack.c.bf16 %v419, %v419
    %v436 = vpack.c.bf16 %v420, %v420
    %v437 = vpack.c.bf16 %v421, %v421
    %v438 = vpack.c.bf16 %v422, %v422
    %v439 = vpack.c.bf16 %v423, %v423
    %v440 = vpack.c.bf16 %v424, %v424
    %v441 = vpack.c.bf16 %v425, %v425
    %v442 = vpack.c.bf16 %v426, %v426
    %v443 = vpack.c.bf16 %v427, %v427
    %v444 = vpack.c.bf16 %v428, %v428
    %v445 = vpack.c.bf16 %v429, %v429
    %v446 = vpack.c.bf16 %v430, %v430
    %v447 = vpack.c.bf16 %v431, %v431
    %448 = vst [vmem:[#allocation7] sm:$0xf] %v432
    %449 = vst [vmem:[#allocation7 + $0x4] sm:$0xf] %v433
    %450 = vst [vmem:[#allocation7 + $0x8] sm:$0xf] %v434
    %451 = vst [vmem:[#allocation7 + $0xc] sm:$0xf] %v435
    %452 = vst [vmem:[#allocation7 + $0x10] sm:$0xf] %v436
    %453 = vst [vmem:[#allocation7 + $0x14] sm:$0xf] %v437
    %454 = vst [vmem:[#allocation7 + $0x18] sm:$0xf] %v438
    %455 = vst [vmem:[#allocation7 + $0x1c] sm:$0xf] %v439
    %456 = vst [vmem:[#allocation7 + $0x20] sm:$0xf] %v440
    %457 = vst [vmem:[#allocation7 + $0x24] sm:$0xf] %v441
    %458 = vst [vmem:[#allocation7 + $0x28] sm:$0xf] %v442
    %459 = vst [vmem:[#allocation7 + $0x2c] sm:$0xf] %v443
    %460 = vst [vmem:[#allocation7 + $0x30] sm:$0xf] %v444
    %461 = vst [vmem:[#allocation7 + $0x34] sm:$0xf] %v445
    %462 = vst [vmem:[#allocation7 + $0x38] sm:$0xf] %v446
    %463 = vst [vmem:[#allocation7 + $0x3c] sm:$0xf] %v447
    // Predicated region
    $region18: #{tpu_custom_call.1} parent=1 // pred_check
      _
    $region19: #{tpu_custom_call.1} parent=1 // pred_check_branch
      %465 = sbr.rel (0) target = $region21
    $region20: #{tpu_custom_call.1} parent=1 // pred_region
      %467 = vsyncadd [#allocation4], 0
      %s468 = sshll.u32 [#allocation7], 4
      %s469 = int_to_ptr.vmem [resolvable:$true] %s468
      %s470 = sshll.u32 %s2, 4
      %s471 = int_to_ptr.hbm [resolvable:$true] %s470
      %476 = dma.vmem_to_hbm [thread:$0]  %s469, 1024, %s471, [#allocation4], 64, 64, 4
    $region21: #{tpu_custom_call.1} parent=1 // pred_fallthru
      _
    // Predicated region
    $region22: #{tpu_custom_call.1} parent=1 // pred_check
      _
    $region23: #{tpu_custom_call.1} parent=1 // pred_check_branch
      %478 = sbr.rel (0) target = $region25
    $region24: #{tpu_custom_call.1} parent=1 // pred_region
      %480 = dma.done [#allocation4], 1024
    $region25: #{tpu_custom_call.1} parent=1 // pred_fallthru
      _
    %481 = vsyncpa [#allocation3], 1
    %482 = vsyncpa [#allocation6], 1
    %483 = vsyncpa [#allocation4], 1

</llo_original>
